<compile_context>
chip_gen: v7x
topology: tpu7x:2x2x1
jax: 0.10.0
libtpu: 0.0.40
codegen_flags: <defaults>
</compile_context>

<pallas_src>
import functools
import math

import jax
import jax.numpy as jnp
import numpy as np
from jax.experimental import pallas as pl
from jax.experimental.pallas import tpu as pltpu

CORRECT_PROB = 0.99

_HPARAMS = {
    "resnet18": (0.1, 20.0, 100.0),
    "resnext": (0.5, 40.0, 1.0),
    "densenet121": (0.1, 40.0, 1.0),
}
_DEFAULT_HPARAMS = (0.1, 40.0, 1.0)


def _teacher_constants(K, T):
    """Closed-form softmax(teacher_soft / T): two distinct values per row."""
    eps = (1.0 - CORRECT_PROB) / (K - 1)
    a = CORRECT_PROB / T
    b = eps / T
    mx = max(a, b)
    log_den = mx + math.log(math.exp(a - mx) + (K - 1) * math.exp(b - mx))
    log_p_hot = a - log_den
    log_p_other = b - log_den
    p_hot = math.exp(log_p_hot)
    p_other = math.exp(log_p_other)
    # sum_j p_j * log(p_j) — identical for every row
    kl_const = p_hot * log_p_hot + (K - 1) * p_other * log_p_other
    return p_hot, p_other, kl_const


def _chip_config():
    """Returns (vmem_limit_bytes, num_tensorcores) with conservative fallbacks."""
    vmem_cap = None
    two_tc = False
    try:
        info = pltpu.get_tpu_info()
        cap = getattr(info, "vmem_capacity_bytes", None)
        if cap:
            vmem_cap = int(cap)
    except Exception:
        pass
    try:
        kind = jax.devices()[0].device_kind.lower()
        if "v7" in kind or "tpu7" in kind:
            two_tc = True                      # v7x: 2 TCs, 64 MiB VMEM per TC
            if vmem_cap is None:
                vmem_cap = 64 << 20
        elif vmem_cap is None:
            vmem_cap = 128 << 20               # v5e / v6e physical VMEM
    except Exception:
        pass
    if vmem_cap is None:
        vmem_cap = 64 << 20                    # safe lower bound
    vmem_limit = min(int(vmem_cap * 3 // 4), 96 << 20)
    return vmem_limit, (2 if two_tc else 1)


def _pick_tile_n(N, K, itemsize, vmem_limit):
    """Largest batch tile whose pipelined footprint fits the VMEM budget."""
    # Per-row VMEM cost: 2 double-buffered logits rows (native dtype), ~4 f32
    # (tile_n, K) body intermediates, plus the lane-padded label buffers and the
    # two f32 accumulators (1 used lane padded to a (8,128) tile => 512 B/row).
    per_row = 2 * K * itemsize + 4 * K * 4 + 4 * 512
    budget = int(vmem_limit * 0.6)
    tile_n = budget // per_row
    sub = 8 * max(1, 4 // max(1, itemsize))    # f32: 8, bf16: 16, int8/fp8: 32
    tile_n = max(sub, min(tile_n, 8192))
    n_pad = ((N + sub - 1) // sub) * sub
    tile_n = min(tile_n, n_pad)
    tile_n = max(sub, (tile_n // sub) * sub)
    return tile_n


def _tfkd_kernel(logits_ref, labels_ref, out_ref, ce_acc, kl_acc, *,
                 N, K, tile_n, tiles_per_chunk,
                 alpha, multiplier, p_hot, p_other, kl_const):
    c = pl.program_id(0)          # chunk (TensorCore split on 2-TC chips)
    i = pl.program_id(1)          # batch-tile index inside the chunk

    @pl.when(i == 0)
    def _init():
        ce_acc[...] = jnp.zeros_like(ce_acc)
        kl_acc[...] = jnp.zeros_like(kl_acc)

    # Global row offset of this tile (unclamped, so phantom tiles skip compute).
    row0 = (c * tiles_per_chunk + i) * tile_n

    @pl.when(row0 < N)
    def _compute():
        x = logits_ref[...].astype(jnp.float32)            # (tile_n, K) f32
        labels = labels_ref[...]                            # (tile_n, 1) int32

        rows = jax.lax.broadcasted_iota(jnp.int32, (tile_n, 1), 0) + row0
        valid = rows < N                                     # tail-row mask

        col = jax.lax.broadcasted_iota(jnp.int32, (tile_n, K), 1)
        onehot = col == labels                               # (tile_n, K) bool

        # log-softmax statistics without materializing log_q persistently.
        m = jnp.max(x, axis=1, keepdims=True)                # (tile_n, 1)
        lse = jnp.log(jnp.sum(jnp.exp(x - m), axis=1, keepdims=True))
        shift = m + lse                                      # per-row log-normalizer
        logit_lab = jnp.sum(jnp.where(onehot, x, 0.0), axis=1, keepdims=True)
        # Direct row-sum of log_softmax (better conditioned than row_sum - K*shift).
        sum_logq = jnp.sum(x - shift, axis=1, keepdims=True)

        logq_lab = logit_lab - shift                         # log_softmax at label
        ce_rows = -logq_lab
        kl_rows = (jnp.float32(kl_const)
                   - jnp.float32(p_other) * sum_logq
                   - jnp.float32(p_hot - p_other) * logq_lab)

        zeros = jnp.zeros_like(ce_rows)
        # Per-row masking happens here; no cross-row reduction touches invalid rows.
        ce_acc[...] += jnp.where(valid, ce_rows, zeros)
        kl_acc[...] += jnp.where(valid, kl_rows, zeros)

    @pl.when(i == tiles_per_chunk - 1)
    def _finalize():
        # Single cross-sublane reduction + scalar combine per chunk.
        ce_sum = jnp.sum(ce_acc[...])
        kl_sum = jnp.sum(kl_acc[...])
        loss = ((1.0 - alpha) * ce_sum / jnp.float32(N)
                + alpha * multiplier * kl_sum / jnp.float32(N * K))
        out_ref[...] = jnp.full((8, 128), loss, dtype=jnp.float32)


def tfkd_loss(logits, labels, *, model="resnet18", tile_n=None, num_parallel=None):
    """logits: (N, K) float (any dtype), labels: (N,) int -> scalar float32 loss."""
    N, K = logits.shape
    assert K >= 2, "TFKD teacher distribution needs at least 2 classes"
    alpha, T, multiplier = _HPARAMS.get(model, _DEFAULT_HPARAMS)
    p_hot, p_other, kl_const = _teacher_constants(K, T)

    itemsize = jnp.dtype(logits.dtype).itemsize
    vmem_limit, n_cores = _chip_config()

    if tile_n is None:
        tile_n = _pick_tile_n(N, K, itemsize, vmem_limit)
    else:
        tile_n = max(8, min(int(tile_n), ((N + 7) // 8) * 8))
        tile_n = (tile_n // 8) * 8
    assert tile_n % 8 == 0

    num_tiles = pl.cdiv(N, tile_n)
    if num_parallel is None:
        # 2-way chunk split only pays on 2-TC chips (v7x); pure overhead elsewhere.
        num_parallel = 2 if (n_cores >= 2 and num_tiles >= 2) else 1
    else:
        num_parallel = max(1, min(int(num_parallel), num_tiles))
    tiles_per_chunk = pl.cdiv(num_tiles, num_parallel)

    labels2d = labels.reshape(N, 1).astype(jnp.int32)

    def _tile_map(c, i):
        # Clamp phantom tiles of the last chunk to a valid block; their compute is
        # skipped in-kernel via @pl.when(row0 < N).
        return (jnp.minimum(c * tiles_per_chunk + i, num_tiles - 1), 0)

    kernel = functools.partial(
        _tfkd_kernel,
        N=N, K=K, tile_n=tile_n, tiles_per_chunk=tiles_per_chunk,
        alpha=float(alpha), multiplier=float(multiplier),
        p_hot=float(p_hot), p_other=float(p_other), kl_const=float(kl_const))

    out = pl.pallas_call(
        kernel,
        out_shape=jax.ShapeDtypeStruct((num_parallel * 8, 128), jnp.float32),
        grid_spec=pltpu.PrefetchScalarGridSpec(
            num_scalar_prefetch=0,
            grid=(num_parallel, tiles_per_chunk),
            in_specs=[
                pl.BlockSpec((tile_n, K), _tile_map),   # logits, native dtype
                pl.BlockSpec((tile_n, 1), _tile_map),   # labels
            ],
            out_specs=pl.BlockSpec((8, 128), lambda c, i: (c, 0)),
            scratch_shapes=[
                pltpu.VMEM((tile_n, 1), jnp.float32),   # running per-row CE sums
                pltpu.VMEM((tile_n, 1), jnp.float32),   # running per-row KL sums
            ],
        ),
        compiler_params=pltpu.CompilerParams(
            dimension_semantics=("parallel", "arbitrary"),
            vmem_limit_bytes=int(vmem_limit),
        ),
    )(logits, labels2d)

    partials = out.reshape(num_parallel, 8, 128)[:, 0, 0]
    return jnp.sum(partials)


def tfkd_loss_ref(logits, labels, *, model="resnet18"):
    """Pure-JAX reference mirroring the PyTorch forward."""
    N, K = logits.shape
    alpha, T, multiplier = _HPARAMS.get(model, _DEFAULT_HPARAMS)
    x = logits.astype(jnp.float32)
    onehot = jax.nn.one_hot(labels, K, dtype=jnp.float32)
    log_q = jax.nn.log_softmax(x, axis=1)
    loss_ce = -jnp.mean(jnp.sum(onehot * log_q, axis=1))
    teacher = onehot * CORRECT_PROB + (1.0 - onehot) * ((1.0 - CORRECT_PROB) / (K - 1))
    p = jax.nn.softmax(teacher / T, axis=1)
    kl = jnp.sum(p * (jnp.log(p) - log_q)) / (N * K)
    return (1.0 - alpha) * loss_ce + alpha * kl * multiplier


if __name__ == "__main__":
    key = jax.random.PRNGKey(0)
    k1, k2, k3, k4 = jax.random.split(key, 4)

    # Case 1: default adaptive tiling. N=10 (not a multiple of 8 -> tail mask),
    # K=128 (lane-dense class axis); chip-aware tile/VMEM/parallel selection.
    N1, K1 = 10, 128
    logits1 = jax.random.normal(k1, (N1, K1), dtype=jnp.float32) * 3.0
    labels1 = jax.random.randint(k2, (N1,), 0, K1, dtype=jnp.int32)
    out1 = jax.block_until_ready(tfkd_loss(logits1, labels1))
    ref1 = jax.block_until_ready(tfkd_loss_ref(logits1, labels1))
    assert np.allclose(np.asarray(out1), np.asarray(ref1), rtol=1e-4, atol=1e-5), (out1, ref1)

    # Case 2: forced small tiles + 2-way chunk split with an odd tile count ->
    # exercises the phantom-tile skip, tail mask and multi-chunk partial sum.
    N2, K2 = 20, 128
    logits2 = jax.random.normal(k3, (N2, K2), dtype=jnp.float32) * 3.0
    labels2 = jax.random.randint(k4, (N2,), 0, K2, dtype=jnp.int32)
    out2 = jax.block_until_ready(tfkd_loss(logits2, labels2, tile_n=8, num_parallel=2))
    ref2 = jax.block_until_ready(tfkd_loss_ref(logits2, labels2))
    assert np.allclose(np.asarray(out2), np.asarray(ref2), rtol=1e-4, atol=1e-5), (out2, ref2)

    print("KERNEL_OK")
</pallas_src>

<mosaic_0001>
module attributes {stable_mosaic.version = 11 : i64} {
  func.func @_tfkd_kernel(%arg0: i32, %arg1: i32, %arg2: memref<16x128xf32, #tpu.memory_space<vmem>>, %arg3: memref<16x1xi32, #tpu.memory_space<vmem>>, %arg4: memref<8x128xf32, #tpu.memory_space<vmem>>, %arg5: memref<16x1xf32, #tpu.memory_space<vmem>>, %arg6: memref<16x1xf32, #tpu.memory_space<vmem>>) attributes {dimension_semantics = [#tpu.dimension_semantics<parallel>, #tpu.dimension_semantics<arbitrary>], iteration_bounds = array<i64: 1, 1>, scalar_prefetch = 0 : i64, scratch_operands = 2 : i64, tpu.core_type = #tpu.core_type<tc>, window_params = [{transform_indices = @transform_0, window_bounds = array<i64: 16, 128>}, {transform_indices = @transform_1, window_bounds = array<i64: 16, 1>}, {transform_indices = @transform_2, window_bounds = array<i64: 8, 128>}]} {
    %c0_i32 = arith.constant 0 : i32
    %0 = arith.cmpi eq, %arg1, %c0_i32 : i32
    %1 = arith.extui %0 : i1 to i32
    %c0_i32_0 = arith.constant 0 : i32
    %2 = arith.cmpi ne, %1, %c0_i32_0 : i32
    scf.if %2 {
      %cst = arith.constant 0.000000e+00 : f32
      %12 = vector.broadcast %cst : f32 to vector<16x1xf32>
      %c0 = arith.constant 0 : index
      %c0_4 = arith.constant 0 : index
      %13 = vector.load %arg5[%c0, %c0_4] : memref<16x1xf32, #tpu.memory_space<vmem>>, vector<16x1xf32>
      tpu.vector_store %arg5[%c0, %c0_4], %12 {strides = array<i32>} : memref<16x1xf32, #tpu.memory_space<vmem>>, vector<16x1xf32>,
      %cst_5 = arith.constant 0.000000e+00 : f32
      %14 = vector.broadcast %cst_5 : f32 to vector<16x1xf32>
      %c0_6 = arith.constant 0 : index
      %c0_7 = arith.constant 0 : index
      %15 = vector.load %arg6[%c0_6, %c0_7] : memref<16x1xf32, #tpu.memory_space<vmem>>, vector<16x1xf32>
      tpu.vector_store %arg6[%c0_6, %c0_7], %14 {strides = array<i32>} : memref<16x1xf32, #tpu.memory_space<vmem>>, vector<16x1xf32>,
    } else {
    }
    %c1_i32 = arith.constant 1 : i32
    %3 = arith.muli %arg0, %c1_i32 : i32
    %4 = arith.addi %3, %arg1 : i32
    %c16_i32 = arith.constant 16 : i32
    %5 = arith.muli %4, %c16_i32 : i32
    %c10_i32 = arith.constant 10 : i32
    %6 = arith.cmpi slt, %5, %c10_i32 : i32
    %7 = arith.extui %6 : i1 to i32
    %c0_i32_1 = arith.constant 0 : i32
    %8 = arith.cmpi ne, %7, %c0_i32_1 : i32
    scf.if %8 {
      %c0 = arith.constant 0 : index
      %c0_4 = arith.constant 0 : index
      %12 = vector.load %arg2[%c0, %c0_4] : memref<16x128xf32, #tpu.memory_space<vmem>>, vector<16x128xf32>
      %c0_5 = arith.constant 0 : index
      %c0_6 = arith.constant 0 : index
      %13 = vector.load %arg3[%c0_5, %c0_6] : memref<16x1xi32, #tpu.memory_space<vmem>>, vector<16x1xi32>
      %14 = tpu.iota {dimensions = array<i32: 0>} : vector<16x1xi32>
      %15 = vector.broadcast %5 : i32 to vector<16x1xi32>
      %16 = arith.addi %14, %15 : vector<16x1xi32>
      %c10_i32_7 = arith.constant 10 : i32
      %17 = vector.broadcast %c10_i32_7 : i32 to vector<16x1xi32>
      %18 = arith.cmpi slt, %16, %17 : vector<16x1xi32>
      %19 = tpu.iota {dimensions = array<i32: 1>} : vector<16x128xi32>
      %20 = vector.broadcast %13 : vector<16x1xi32> to vector<16x128xi32>
      %21 = arith.cmpi eq, %19, %20 : vector<16x128xi32>
      %cst = arith.constant dense<0xFF800000> : vector<16xf32>
      %22 = vector.multi_reduction <maximumf>, %12, %cst [1] : vector<16x128xf32> to vector<16xf32>
      %23 = vector.shape_cast %22 : vector<16xf32> to vector<16x1xf32>
      %24 = vector.broadcast %23 : vector<16x1xf32> to vector<16x128xf32>
      %25 = arith.subf %12, %24 : vector<16x128xf32>
      %26 = math.exp %25 : vector<16x128xf32>
      %cst_8 = arith.constant dense<0.000000e+00> : vector<16xf32>
      %27 = vector.multi_reduction <add>, %26, %cst_8 [1] : vector<16x128xf32> to vector<16xf32>
      %28 = vector.shape_cast %27 : vector<16xf32> to vector<16x1xf32>
      %29 = math.log %28 : vector<16x1xf32>
      %30 = arith.addf %23, %29 : vector<16x1xf32>
      %cst_9 = arith.constant 0.000000e+00 : f32
      %31 = vector.broadcast %cst_9 : f32 to vector<16x128xf32>
      %32 = arith.select %21, %12, %31 : vector<16x128xi1>, vector<16x128xf32>
      %cst_10 = arith.constant dense<0.000000e+00> : vector<16xf32>
      %33 = vector.multi_reduction <add>, %32, %cst_10 [1] : vector<16x128xf32> to vector<16xf32>
      %34 = vector.shape_cast %33 : vector<16xf32> to vector<16x1xf32>
      %35 = vector.broadcast %30 : vector<16x1xf32> to vector<16x128xf32>
      %36 = arith.subf %12, %35 : vector<16x128xf32>
      %cst_11 = arith.constant dense<0.000000e+00> : vector<16xf32>
      %37 = vector.multi_reduction <add>, %36, %cst_11 [1] : vector<16x128xf32> to vector<16xf32>
      %38 = vector.shape_cast %37 : vector<16xf32> to vector<16x1xf32>
      %39 = arith.subf %34, %30 : vector<16x1xf32>
      %cst_12 = arith.constant 0.000000e+00 : f32
      %40 = vector.broadcast %cst_12 : f32 to vector<16x1xf32>
      %41 = arith.subf %40, %39 : vector<16x1xf32>
      %cst_13 = arith.constant 0.00780940428 : f32
      %42 = vector.broadcast %cst_13 : f32 to vector<16x1xf32>
      %43 = arith.mulf %42, %38 : vector<16x1xf32>
      %cst_14 = arith.constant -4.85202026 : f32
      %44 = vector.broadcast %cst_14 : f32 to vector<16x1xf32>
      %45 = arith.subf %44, %43 : vector<16x1xf32>
      %cst_15 = arith.constant 3.96260526E-4 : f32
      %46 = vector.broadcast %cst_15 : f32 to vector<16x1xf32>
      %47 = arith.mulf %46, %39 : vector<16x1xf32>
      %48 = arith.subf %45, %47 : vector<16x1xf32>
      %cst_16 = arith.constant 0.000000e+00 : f32
      %49 = vector.broadcast %cst_16 : f32 to vector<16x1xf32>
      %c0_17 = arith.constant 0 : index
      %c0_18 = arith.constant 0 : index
      %50 = vector.load %arg5[%c0_17, %c0_18] : memref<16x1xf32, #tpu.memory_space<vmem>>, vector<16x1xf32>
      %51 = arith.select %18, %41, %49 : vector<16x1xi1>, vector<16x1xf32>
      %52 = arith.addf %50, %51 : vector<16x1xf32>
      %c0_19 = arith.constant 0 : index
      %c0_20 = arith.constant 0 : index
      %53 = vector.load %arg5[%c0_19, %c0_20] : memref<16x1xf32, #tpu.memory_space<vmem>>, vector<16x1xf32>
      tpu.vector_store %arg5[%c0_19, %c0_20], %52 {strides = array<i32>} : memref<16x1xf32, #tpu.memory_space<vmem>>, vector<16x1xf32>,
      %c0_21 = arith.constant 0 : index
      %c0_22 = arith.constant 0 : index
      %54 = vector.load %arg6[%c0_21, %c0_22] : memref<16x1xf32, #tpu.memory_space<vmem>>, vector<16x1xf32>
      %55 = arith.select %18, %48, %49 : vector<16x1xi1>, vector<16x1xf32>
      %56 = arith.addf %54, %55 : vector<16x1xf32>
      %c0_23 = arith.constant 0 : index
      %c0_24 = arith.constant 0 : index
      %57 = vector.load %arg6[%c0_23, %c0_24] : memref<16x1xf32, #tpu.memory_space<vmem>>, vector<16x1xf32>
      tpu.vector_store %arg6[%c0_23, %c0_24], %56 {strides = array<i32>} : memref<16x1xf32, #tpu.memory_space<vmem>>, vector<16x1xf32>,
    } else {
    }
    %c0_i32_2 = arith.constant 0 : i32
    %9 = arith.cmpi eq, %arg1, %c0_i32_2 : i32
    %10 = arith.extui %9 : i1 to i32
    %c0_i32_3 = arith.constant 0 : i32
    %11 = arith.cmpi ne, %10, %c0_i32_3 : i32
    scf.if %11 {
      %c0 = arith.constant 0 : index
      %c0_4 = arith.constant 0 : index
      %12 = vector.load %arg5[%c0, %c0_4] : memref<16x1xf32, #tpu.memory_space<vmem>>, vector<16x1xf32>
      %13 = vector.shape_cast %12 : vector<16x1xf32> to vector<1x16x1xf32>
      %cst = arith.constant dense<0.000000e+00> : vector<1xf32>
      %14 = vector.multi_reduction <add>, %13, %cst [1, 2] : vector<1x16x1xf32> to vector<1xf32>
      %15 = vector.shape_cast %14 : vector<1xf32> to vector<1x1x1xf32>
      %16 = vector.extract %15[0, 0, 0] : f32 from vector<1x1x1xf32>
      %c0_5 = arith.constant 0 : index
      %c0_6 = arith.constant 0 : index
      %17 = vector.load %arg6[%c0_5, %c0_6] : memref<16x1xf32, #tpu.memory_space<vmem>>, vector<16x1xf32>
      %18 = vector.shape_cast %17 : vector<16x1xf32> to vector<1x16x1xf32>
      %cst_7 = arith.constant dense<0.000000e+00> : vector<1xf32>
      %19 = vector.multi_reduction <add>, %18, %cst_7 [1, 2] : vector<1x16x1xf32> to vector<1xf32>
      %20 = vector.shape_cast %19 : vector<1xf32> to vector<1x1x1xf32>
      %21 = vector.extract %20[0, 0, 0] : f32 from vector<1x1x1xf32>
      %cst_8 = arith.constant 0.899999976 : f32
      %22 = arith.mulf %cst_8, %16 : f32
      %cst_9 = arith.constant 1.000000e+01 : f32
      %23 = arith.divf %22, %cst_9 : f32
      %cst_10 = arith.constant 1.000000e+01 : f32
      %24 = arith.mulf %cst_10, %21 : f32
      %cst_11 = arith.constant 1.280000e+03 : f32
      %25 = arith.divf %24, %cst_11 : f32
      %26 = arith.addf %23, %25 : f32
      %27 = vector.broadcast %26 : f32 to vector<8x128xf32>
      %c0_12 = arith.constant 0 : index
      %c0_13 = arith.constant 0 : index
      %28 = vector.load %arg4[%c0_12, %c0_13] : memref<8x128xf32, #tpu.memory_space<vmem>>, vector<8x128xf32>
      tpu.vector_store %arg4[%c0_12, %c0_13], %27 {strides = array<i32>} : memref<8x128xf32, #tpu.memory_space<vmem>>, vector<8x128xf32>,
    } else {
    }
    return
  }
  func.func @transform_0(%arg0: i32, %arg1: i32) -> (i32, i32) {
    %c1_i32 = arith.constant 1 : i32
    %0 = arith.muli %arg0, %c1_i32 : i32
    %1 = arith.addi %0, %arg1 : i32
    %c0_i32 = arith.constant 0 : i32
    %2 = arith.minsi %1, %c0_i32 : i32
    %c0_i32_0 = arith.constant 0 : i32
    %c0_i32_1 = arith.constant 0 : i32
    return %2, %c0_i32_0 : i32, i32
  }
  func.func @transform_1(%arg0: i32, %arg1: i32) -> (i32, i32) {
    %c1_i32 = arith.constant 1 : i32
    %0 = arith.muli %arg0, %c1_i32 : i32
    %1 = arith.addi %0, %arg1 : i32
    %c0_i32 = arith.constant 0 : i32
    %2 = arith.minsi %1, %c0_i32 : i32
    %c0_i32_0 = arith.constant 0 : i32
    %c0_i32_1 = arith.constant 0 : i32
    return %2, %c0_i32_0 : i32, i32
  }
  func.func @transform_2(%arg0: i32, %arg1: i32) -> (i32, i32) {
    %c0_i32 = arith.constant 0 : i32
    %c0_i32_0 = arith.constant 0 : i32
    return %arg0, %c0_i32 : i32, i32
  }
}

</mosaic_0001>

<llo_original>
// kernel: tpu_custom_call.1
$region0: #{tpu_custom_call.1}
  #allocation0 [shape = 'u32[]', space=smem, size = 0x4, offset = 0x4, fixed_abs, tag = 'smem constant byte address 0x4 - core index']
  #allocation1 [shape = 'u32[144,128]{1,0:T(1,128)}', space=vmem, size = 0x12000, scoped, tag = 'internal scratch']
  #allocation2 [shape = 'f32[16,1]{1,0:T(8,128)}', space=vmem, size = 0x2000, scoped, tag = 'scratch operand']
  #allocation3 [shape = 'f32[16,1]{1,0:T(8,128)}', space=vmem, size = 0x2000, scoped, tag = 'scratch operand']
  %s0 = inlined_call_operand.hbm [shape: f32[10,128], index: 0, kind: input, shape index: {}]
  %s1 = inlined_call_operand.hbm [shape: s32[10,1], index: 1, kind: input, shape index: {}]
  %s2 = inlined_call_operand.hbm [shape: f32[8,128], index: 2, kind: output, shape index: {}]
  %s3 = sld [smem:[#allocation0]]
  $region38: #{tpu_custom_call.1} parent=0
    _
  %s5 = ssub.s32 1, %s3
  %s6 = scalar_select 0, %s5, %s3
  $region1: #{tpu_custom_call.1} parent=0
    #allocation4 [shape = 'u8[8192]{0}', space=vmem, size = 0x2000, scoped, tag = 'input window, operand 0, single buffered']
    #allocation5 [shape = 's32[1]{0}', space=sflag, size = 0x4, scoped, tag = 'scoped memory for tpu_custom_call.1']
    #allocation6 [shape = 's32[1]{0}', space=sflag, size = 0x4, scoped, tag = 'scoped memory for tpu_custom_call.1']
    #allocation7 [shape = 'u8[8192]{0}', space=vmem, size = 0x2000, scoped, tag = 'input window, operand 1, single buffered']
    #allocation8 [shape = 's32[1]{0}', space=sflag, size = 0x4, scoped, tag = 'scoped memory for tpu_custom_call.1']
    #allocation9 [shape = 'u8[4096]{0}', space=vmem, size = 0x1000, scoped, tag = 'output window, operand 0, single buffered']
    %7 = vsyncpa [#allocation5], 0
    %8 = vsyncpa [#allocation8], 0
    %9 = vsyncpa [#allocation6], 0
    // Predicated region
    $region2: #{tpu_custom_call.1} parent=1 // pred_check
      _
    $region3: #{tpu_custom_call.1} parent=1 // pred_check_branch
      %11 = sbr.rel (0) target = $region5
    $region4: #{tpu_custom_call.1} parent=1 // pred_region
      %s12 = sadd.s32 0, 0
      %p13 = scmp.lt.s32.totalorder %s12, 0
      %s14 = scalar_select %p13, %s12, 0
      %s15 = smul.u32 2, %s14
      %s17 = ssub.s32 256, 256
      %18 = vsyncadd [#allocation5], %s17
      %s19 = smul.addr %s15, 128
      %s20 = scalar_lea.hbm %s0, %s19
      %s21 = sshll.u32 [#allocation4], 4
      %s22 = int_to_ptr.vmem [resolvable:$true] %s21
      %27 = dma.hbm_to_vmem [thread:$0]  %s20, 256, %s22, [#allocation5], 128, 128, 8
    $region5: #{tpu_custom_call.1} parent=1 // pred_fallthru
      _
    // Predicated region
    $region6: #{tpu_custom_call.1} parent=1 // pred_check
      _
    $region7: #{tpu_custom_call.1} parent=1 // pred_check_branch
      %29 = sbr.rel (0) target = $region9
    $region8: #{tpu_custom_call.1} parent=1 // pred_region
      %s30 = sadd.s32 0, 0
      %p31 = scmp.lt.s32.totalorder %s30, 0
      %s32 = scalar_select %p31, %s30, 0
      %s33 = smul.u32 2, %s32
      %s35 = ssub.s32 256, 256
      %36 = vsyncadd [#allocation8], %s35
      %s37 = smul.addr %s33, 128
      %s38 = scalar_lea.hbm %s1, %s37
      %s39 = sshll.u32 [#allocation7], 4
      %s40 = int_to_ptr.vmem [resolvable:$true] %s39
      %45 = dma.hbm_to_vmem [thread:$0]  %s38, 256, %s40, [#allocation8], 128, 128, 8
    $region9: #{tpu_custom_call.1} parent=1 // pred_fallthru
      _
    // Predicated region
    $region10: #{tpu_custom_call.1} parent=1 // pred_check
      _
    $region11: #{tpu_custom_call.1} parent=1 // pred_check_branch
      %47 = sbr.rel (0) target = $region13
    $region12: #{tpu_custom_call.1} parent=1 // pred_region
      %48 = dma.done [#allocation5], 256
    $region13: #{tpu_custom_call.1} parent=1 // pred_fallthru
      _
    // Predicated region
    $region14: #{tpu_custom_call.1} parent=1 // pred_check
      _
    $region15: #{tpu_custom_call.1} parent=1 // pred_check_branch
      %50 = sbr.rel (0) target = $region17
    $region16: #{tpu_custom_call.1} parent=1 // pred_region
      %51 = dma.done [#allocation8], 256
    $region17: #{tpu_custom_call.1} parent=1 // pred_fallthru
      _
    %s52 = sadd.s32 0, 0
    %p53 = scmp.lt.s32.totalorder %s52, 0
    %s54 = scalar_select %p53, %s52, 0
    %s55 = smul.u32 2, %s54
    %s56 = sadd.s32 0, 0
    %p57 = scmp.lt.s32.totalorder %s56, 0
    %s58 = scalar_select %p57, %s56, 0
    %s59 = smul.u32 2, %s58
    %p60 = scmp.eq.s32.totalorder 0, 0
    // Predicated region
    $region18: #{tpu_custom_call.1} parent=1 // pred_check
      %p61 = pneg %p60
    $region19: #{tpu_custom_call.1} parent=1 // pred_check_branch
      %63 = sbr.rel (%p61) target = $region21
    $region20: #{tpu_custom_call.1} parent=1 // pred_region
      %vm64 = vcmask 7168
      %65 = vst.msk [vmem:[#allocation2] sm:$0xff] %vm64, 0.0
      %66 = vst.msk [vmem:[#allocation2 + $0x8] sm:$0xff] %vm64, 0.0
      %67 = vst.msk [vmem:[#allocation3] sm:$0xff] %vm64, 0.0
      %68 = vst.msk [vmem:[#allocation3 + $0x8] sm:$0xff] %vm64, 0.0
    $region21: #{tpu_custom_call.1} parent=1 // pred_fallthru
      _
    %s69 = sadd.s32 0, 0
    %s70 = smul.u32 %s69, 16
    %p71 = scmp.lt.s32.totalorder %s70, 10
    // Predicated region
    $region22: #{tpu_custom_call.1} parent=1 // pred_check
      %p72 = pneg %p71
    $region23: #{tpu_custom_call.1} parent=1 // pred_check_branch
      %74 = sbr.rel (%p72) target = $region25
    $region24: #{tpu_custom_call.1} parent=1 // pred_region
      %v75 = vld [vmem:[#allocation4] sm:$0xff]
      %v76 = vld [vmem:[#allocation4 + $0x8] sm:$0xff]
      %v77 = vld [vmem:[#allocation7] sm:$0xff]
      %v78 = vld [vmem:[#allocation7 + $0x8] sm:$0xff]
      %v79 = vlaneseq
      %v80 = vshrl.u32 %v79, 7
      %v81 = vadd.s32 %v80, 8
      %v82 = vstv %s70
      %v83 = vadd.s32 %v80, %v82
      %v84 = vadd.s32 %v81, %v82
      %vm85 = vcmp.lt.s32.totalorder %v83, 10
      %vm86 = vcmp.lt.s32.totalorder %v84, 10
      %v87 = vlaneseq
      %v88 = vand.u32 %v87, 127
      %89 = vset.pattern.permute.xlu0 0
      %90 = vperm.xlu0 %89, %v77
      %v91 = vpop.permute.xlu0 %90
      %92 = vset.pattern.permute.xlu0 0
      %93 = vperm.xlu0 %92, %v78
      %v94 = vpop.permute.xlu0 %93
      %vm95 = vcmp.eq.s32.totalorder %v88, %v91
      %vm96 = vcmp.eq.s32.totalorder %v88, %v94
      %97 = vmax.xlane.f32.xlu0 %v75
      %v98 = vpop.xlane.xlu0 %97
      %99 = vmax.xlane.f32.xlu0 %v76
      %v100 = vpop.xlane.xlu0 %99
      %v101 = vsub.f32 %v75, %v98
      %v102 = vsub.f32 %v76, %v100
      %v103 = vmul.f32 %v101, 1.442695
      %v104 = vpow.pop %v103
      %v105 = vmul.f32 %v102, 1.442695
      %v106 = vpow.pop %v105
      %107 = vadd.xlane.f32.xlu0 %v104
      %v108 = vpop.xlane.xlu0 %107
      %109 = vadd.xlane.f32.xlu0 %v106
      %v110 = vpop.xlane.xlu0 %109
      %v111 = vlog2.pop %v108
      %v112 = vmul.f32 %v111, 0.6931472
      %v113 = vlog2.pop %v110
      %v114 = vmul.f32 %v113, 0.6931472
      %v115 = vadd.f32 %v98, %v112
      %v116 = vadd.f32 %v100, %v114
      %v117 = vsel %vm95, %v75, 0.0
      %v118 = vsel %vm96, %v76, 0.0
      %119 = vadd.xlane.f32.xlu0 %v117
      %v120 = vpop.xlane.xlu0 %119
      %121 = vadd.xlane.f32.xlu0 %v118
      %v122 = vpop.xlane.xlu0 %121
      %v123 = vsub.f32 %v75, %v115
      %v124 = vsub.f32 %v76, %v116
      %125 = vadd.xlane.f32.xlu0 %v123
      %v126 = vpop.xlane.xlu0 %125
      %127 = vadd.xlane.f32.xlu0 %v124
      %v128 = vpop.xlane.xlu0 %127
      %v129 = vsub.f32 %v120, %v115
      %v130 = vsub.f32 %v122, %v116
      %v131 = vsub.f32 0.0, %v129
      %v132 = vsub.f32 0.0, %v130
      %v133 = vmul.f32 %v126, 0.0078094043
      %v134 = vmul.f32 %v128, 0.0078094043
      %v135 = vsub.f32 -4.8520203, %v133
      %v136 = vsub.f32 -4.8520203, %v134
      %v137 = vmul.f32 %v129, 0.00039626053
      %v138 = vmul.f32 %v130, 0.00039626053
      %v139 = vsub.f32 %v135, %v137
      %v140 = vsub.f32 %v136, %v138
      %v141 = vld [vmem:[#allocation2] sm:$0xff]
      %v142 = vld [vmem:[#allocation2 + $0x8] sm:$0xff]
      %v143 = vsel %vm85, %v131, 0.0
      %v144 = vsel %vm86, %v132, 0.0
      %v145 = vadd.f32 %v141, %v143
      %v146 = vadd.f32 %v142, %v144
      %vm147 = vcmask 7168
      %148 = vst.msk [vmem:[#allocation2] sm:$0xff] %vm147, %v145
      %149 = vst.msk [vmem:[#allocation2 + $0x8] sm:$0xff] %vm147, %v146
      %v150 = vld [vmem:[#allocation3] sm:$0xff]
      %v151 = vld [vmem:[#allocation3 + $0x8] sm:$0xff]
      %v152 = vsel %vm85, %v139, 0.0
      %v153 = vsel %vm86, %v140, 0.0
      %v154 = vadd.f32 %v150, %v152
      %v155 = vadd.f32 %v151, %v153
      %156 = vst.msk [vmem:[#allocation3] sm:$0xff] %vm147, %v154
      %157 = vst.msk [vmem:[#allocation3 + $0x8] sm:$0xff] %vm147, %v155
    $region25: #{tpu_custom_call.1} parent=1 // pred_fallthru
      _
    // Predicated region
    $region26: #{tpu_custom_call.1} parent=1 // pred_check
      %p158 = pneg %p60
    $region27: #{tpu_custom_call.1} parent=1 // pred_check_branch
      %160 = sbr.rel (%p158) target = $region29
    $region28: #{tpu_custom_call.1} parent=1 // pred_region
      %v161 = vld [vmem:[#allocation2] sm:$0xff]
      %v162 = vld [vmem:[#allocation2 + $0x8] sm:$0xff]
      %vm163 = vcmask 7168
      %v164 = vsel %vm163, %v161, 0.0
      %v165 = vsel %vm163, %v162, 0.0
      %v166 = vadd.f32 %v164, %v165
      %167 = vadd.xlane.f32.xlu0 %v166
      %v168 = vpop.xlane.xlu0 %167
      %v169 = vrot.slane %v168, 4
      %v170 = vadd.f32 %v168, %v169
      %v171 = vrot.slane %v170, 2
      %v172 = vadd.f32 %v170, %v171
      %v173 = vrot.slane %v172, 1
      %v174 = vadd.f32 %v172, %v173
      %s175 = vtos %v174
      %v176 = vld [vmem:[#allocation3] sm:$0xff]
      %v177 = vld [vmem:[#allocation3 + $0x8] sm:$0xff]
      %v178 = vsel %vm163, %v176, 0.0
      %v179 = vsel %vm163, %v177, 0.0
      %v180 = vadd.f32 %v178, %v179
      %181 = vadd.xlane.f32.xlu0 %v180
      %v182 = vpop.xlane.xlu0 %181
      %v183 = vrot.slane %v182, 4
      %v184 = vadd.f32 %v182, %v183
      %v185 = vrot.slane %v184, 2
      %v186 = vadd.f32 %v184, %v185
      %v187 = vrot.slane %v186, 1
      %v188 = vadd.f32 %v186, %v187
      %s189 = vtos %v188
      %s190 = smul.f32 %s175, 0.9
      %v191 = vrcp.pop 10.0
      %s192 = vtos %v191
      %s193 = smul.f32 %s190, %s192
      %s194 = smul.f32 %s189, 10.0
      %v195 = vrcp.pop 1280.0
      %s196 = vtos %v195
      %s197 = smul.f32 %s194, %s196
      %s198 = sadd.f32 %s193, %s197
      %v199 = vstv %s198
      %200 = vst [vmem:[#allocation9] sm:$0xff] %v199
    $region29: #{tpu_custom_call.1} parent=1 // pred_fallthru
      _
    // Predicated region
    $region30: #{tpu_custom_call.1} parent=1 // pred_check
      _
    $region31: #{tpu_custom_call.1} parent=1 // pred_check_branch
      %202 = sbr.rel (0) target = $region33
    $region32: #{tpu_custom_call.1} parent=1 // pred_region
      %s204 = ssub.s32 128, 128
      %205 = vsyncadd [#allocation6], %s204
      %s207 = sshll.u32 [#allocation9], 4
      %s208 = int_to_ptr.vmem [resolvable:$true] %s207
      %210 = dma.vmem_to_hbm [thread:$0]  %s208, 128, %s2, [#allocation6]
    $region33: #{tpu_custom_call.1} parent=1 // pred_fallthru
      _
    // Predicated region
    $region34: #{tpu_custom_call.1} parent=1 // pred_check
      _
    $region35: #{tpu_custom_call.1} parent=1 // pred_check_branch
      %212 = sbr.rel (0) target = $region37
    $region36: #{tpu_custom_call.1} parent=1 // pred_region
      %213 = dma.done [#allocation6], 128
    $region37: #{tpu_custom_call.1} parent=1 // pred_fallthru
      _
    %214 = vsyncpa [#allocation5], 1
    %215 = vsyncpa [#allocation8], 1
    %216 = vsyncpa [#allocation6], 1

</llo_original>
